<compile_context>
chip_gen: v6e
topology: v6e:2x2x1
jax: 0.10.0
libtpu: 0.0.40
codegen_flags: <defaults>
</compile_context>

<pallas_src>
import math
from functools import partial

import jax
import jax.numpy as jnp
from jax.experimental import pallas as pl
from jax.experimental.pallas import tpu as pltpu


def _round_up(x: int, m: int) -> int:
    return ((x + m - 1) // m) * m


def _token_embedding_kernel(tok_ref, emb_ref, o_ref, *, pack, v_pad, vocab):
    # tok_ref: (TG, PACK)           int32   -- PACK tokens per packed 128-lane output row
    # emb_ref: (PACK*Vp, PACK*D)    float32 -- block-diagonal table (sqrt(D) pre-folded)
    # o_ref:   (TG, PACK*D)         out dtype (PACK*D == 128 when packing triggers)
    g = tok_ref.shape[0]
    w = pack * v_pad

    # Clamp ids so out-of-range tokens cannot index a neighbouring diagonal block.
    tok = jnp.clip(tok_ref[...], 0, vocab - 1)                      # (g, pack) int32
    col = jax.lax.broadcasted_iota(jnp.int32, (g, w), 1)            # (g, w)

    # Boolean one-hot: `pack` compares OR-ed together, one final 0/1 materialization.
    mask = col == tok[:, 0:1]                                       # block 0 offset = 0
    for j in range(1, pack):
        mask = jnp.logical_or(mask, col == (tok[:, j:j + 1] + j * v_pad))
    onehot = mask.astype(emb_ref.dtype)                             # {0, 1}

    # Gather-as-matmul on the MXU; HIGHEST keeps the f32 table values exact.
    o_ref[...] = jnp.dot(
        onehot,
        emb_ref[...],
        preferred_element_type=jnp.float32,
        precision=jax.lax.Precision.HIGHEST,
    ).astype(o_ref.dtype)


def build_packed_table(table: jax.Array):
    """Pre-scale by sqrt(D) and pack into the block-diagonal layout.

    Call ONCE (e.g. at model init) and pass the result via token_embedding(..., packed=...).
    Returns (table_bd, pack, v_pad, V, D).
    """
    V, D = table.shape
    pack = (128 // D) if (0 < D < 128 and 128 % D == 0) else 1
    v_pad = _round_up(max(V, 1), 8)                     # sublane-align table rows
    scaled = table.astype(jnp.float32) * jnp.float32(math.sqrt(D))
    table_bd = jnp.zeros((pack * v_pad, pack * D), jnp.float32)
    for j in range(pack):
        table_bd = table_bd.at[j * v_pad:j * v_pad + V, j * D:(j + 1) * D].set(scaled)
    return table_bd, pack, v_pad, V, D


def token_embedding(
    tokens: jax.Array,
    table: jax.Array,
    *,
    packed=None,
    tile_g: int = 2048,
    out_dtype=None,
    min_pallas_tokens: int = 1024,
) -> jax.Array:
    """tokens: [B, S] int, table: [V, D] float -> sqrt(D) * table[tokens] as [B, S, D]."""
    B, S = tokens.shape
    V, D = table.shape
    N = B * S
    out_dtype = table.dtype if out_dtype is None else out_dtype

    # Small-N fast path: pallas launch + padding is pure overhead for tiny batches.
    if N < min_pallas_tokens:
        idx = jnp.clip(tokens.astype(jnp.int32), 0, V - 1)
        return (math.sqrt(D) * jnp.take(table, idx, axis=0)).astype(out_dtype)

    if packed is None:
        packed = build_packed_table(table)              # hoist this call out of hot loops
    table_bd, pack, v_pad, Vp_, Dp_ = packed
    assert (Vp_, Dp_) == (V, D), "packed table does not match `table`"

    # ---- choose the token tile -------------------------------------------------------
    g_needed = pl.cdiv(N, pack)                         # packed output rows actually needed
    tile_cap = max(8, min(tile_g, 4096))                # keep double-buffered VMEM modest
    # Prefer >= 2 balanced grid steps when there is enough work: lets the "parallel" axis
    # split across v7x's two TensorCores and reduces pad waste (harmless on v5e/v6e).
    if g_needed >= 2048:
        tile_cap = min(tile_cap, _round_up(pl.cdiv(g_needed, 2), 8))
    tg0 = max(8, min(tile_cap, _round_up(g_needed, 8)))
    n_steps = pl.cdiv(g_needed, tg0)
    tg = _round_up(pl.cdiv(g_needed, n_steps), 8)       # balanced tile, minimal padding
    tile_n = tg * pack
    n_pad = n_steps * tile_n

    tok = tokens.reshape(-1).astype(jnp.int32)
    tok = jnp.pad(tok, (0, n_pad - N))                  # pad id 0 (valid), sliced off below
    tok = tok.reshape(n_pad // pack, pack)

    kernel = partial(_token_embedding_kernel, pack=pack, v_pad=v_pad, vocab=V)

    out = pl.pallas_call(
        kernel,
        out_shape=jax.ShapeDtypeStruct((n_pad // pack, pack * D), out_dtype),
        grid=(n_steps,),
        in_specs=[
            pl.BlockSpec((tg, pack), lambda i: (i, 0)),                 # token tile
            pl.BlockSpec((pack * v_pad, pack * D), lambda i: (0, 0)),   # resident table
        ],
        out_specs=pl.BlockSpec((tg, pack * D), lambda i: (i, 0)),
        compiler_params=pltpu.CompilerParams(
            dimension_semantics=("parallel",),                          # megacore on v7x
        ),
    )(tok, table_bd)

    # (n_pad/pack, pack*D) row-major has identical layout to (n_pad, D): free reshape.
    return out.reshape(n_pad, D)[:N].reshape(B, S, D)


if __name__ == "__main__":
    charset_size = 38   # typical STR charset size
    embed_dim = 32

    key = jax.random.PRNGKey(0)
    k_emb, k_tok1, k_tok2 = jax.random.split(key, 3)

    # nn.Embedding default init: weights ~ N(0, 1)
    table = jax.random.normal(k_emb, (charset_size, embed_dim), dtype=jnp.float32)

    # Build the packed / pre-scaled table once (hoisted out of the per-call path).
    packed = build_packed_table(table)

    # --- small shape consistent with the module (B=2, S=8); force the Pallas path ------
    B, S = 2, 8
    tokens = jax.random.randint(k_tok1, (B, S), 0, charset_size, dtype=jnp.int32)
    out = token_embedding(tokens, table, packed=packed, min_pallas_tokens=0)
    out = jax.block_until_ready(out)
    ref = math.sqrt(embed_dim) * jnp.take(table, tokens, axis=0)
    assert out.shape == (B, S, embed_dim), out.shape
    assert jnp.allclose(out, ref, atol=1e-5, rtol=1e-5), "small-case mismatch vs reference"

    # --- larger shape exercises the tiled multi-step path (2 grid steps) ---------------
    B2, S2 = 64, 128
    tokens2 = jax.random.randint(k_tok2, (B2, S2), 0, charset_size, dtype=jnp.int32)
    out2 = token_embedding(tokens2, table, packed=packed)
    out2 = jax.block_until_ready(out2)
    ref2 = math.sqrt(embed_dim) * jnp.take(table, tokens2, axis=0)
    assert out2.shape == (B2, S2, embed_dim), out2.shape
    assert jnp.allclose(out2, ref2, atol=1e-5, rtol=1e-5), "large-case mismatch vs reference"

    print("KERNEL_OK")
</pallas_src>

<mosaic_0001>
module attributes {stable_mosaic.version = 11 : i64} {
  func.func @_token_embedding_kernel(%arg0: i32, %arg1: memref<8x4xi32, #tpu.memory_space<vmem>>, %arg2: memref<160x128xf32, #tpu.memory_space<vmem>>, %arg3: memref<8x128xf32, #tpu.memory_space<vmem>>) attributes {dimension_semantics = [#tpu.dimension_semantics<parallel>], iteration_bounds = array<i64: 1>, scalar_prefetch = 0 : i64, scratch_operands = 0 : i64, tpu.core_type = #tpu.core_type<tc>, window_params = [{transform_indices = @transform_0, window_bounds = array<i64: 8, 4>}, {pipeline_mode = #tpu.pipeline_mode<synchronous>, transform_indices = @transform_1, window_bounds = array<i64: 160, 128>}, {transform_indices = @transform_2, window_bounds = array<i64: 8, 128>}]} {
    %c0 = arith.constant 0 : index
    %c0_0 = arith.constant 0 : index
    %0 = vector.load %arg1[%c0, %c0_0] : memref<8x4xi32, #tpu.memory_space<vmem>>, vector<8x4xi32>
    %c0_i32 = arith.constant 0 : i32
    %c37_i32 = arith.constant 37 : i32
    %1 = vector.broadcast %c0_i32 : i32 to vector<8x4xi32>
    %2 = arith.maxsi %1, %0 : vector<8x4xi32>
    %3 = vector.broadcast %c37_i32 : i32 to vector<8x4xi32>
    %4 = arith.minsi %3, %2 : vector<8x4xi32>
    %5 = tpu.iota {dimensions = array<i32: 1>} : vector<8x160xi32>
    %6 = vector.extract_strided_slice %4 {offsets = [0, 0], sizes = [8, 1], strides = [1, 1]} : vector<8x4xi32> to vector<8x1xi32>
    %7 = vector.broadcast %6 : vector<8x1xi32> to vector<8x160xi32>
    %8 = arith.cmpi eq, %5, %7 : vector<8x160xi32>
    %9 = vector.extract_strided_slice %4 {offsets = [0, 1], sizes = [8, 1], strides = [1, 1]} : vector<8x4xi32> to vector<8x1xi32>
    %c40_i32 = arith.constant 40 : i32
    %10 = vector.broadcast %c40_i32 : i32 to vector<8x1xi32>
    %11 = arith.addi %9, %10 : vector<8x1xi32>
    %12 = vector.broadcast %11 : vector<8x1xi32> to vector<8x160xi32>
    %13 = arith.cmpi eq, %5, %12 : vector<8x160xi32>
    %14 = arith.ori %8, %13 : vector<8x160xi1>
    %15 = vector.extract_strided_slice %4 {offsets = [0, 2], sizes = [8, 1], strides = [1, 1]} : vector<8x4xi32> to vector<8x1xi32>
    %c80_i32 = arith.constant 80 : i32
    %16 = vector.broadcast %c80_i32 : i32 to vector<8x1xi32>
    %17 = arith.addi %15, %16 : vector<8x1xi32>
    %18 = vector.broadcast %17 : vector<8x1xi32> to vector<8x160xi32>
    %19 = arith.cmpi eq, %5, %18 : vector<8x160xi32>
    %20 = arith.ori %14, %19 : vector<8x160xi1>
    %21 = vector.extract_strided_slice %4 {offsets = [0, 3], sizes = [8, 1], strides = [1, 1]} : vector<8x4xi32> to vector<8x1xi32>
    %c120_i32 = arith.constant 120 : i32
    %22 = vector.broadcast %c120_i32 : i32 to vector<8x1xi32>
    %23 = arith.addi %21, %22 : vector<8x1xi32>
    %24 = vector.broadcast %23 : vector<8x1xi32> to vector<8x160xi32>
    %25 = arith.cmpi eq, %5, %24 : vector<8x160xi32>
    %26 = arith.ori %20, %25 : vector<8x160xi1>
    %27 = arith.extui %26 : vector<8x160xi1> to vector<8x160xi32>
    %28 = arith.sitofp %27 : vector<8x160xi32> to vector<8x160xf32>
    %c0_1 = arith.constant 0 : index
    %c0_2 = arith.constant 0 : index
    %29 = vector.load %arg2[%c0_1, %c0_2] : memref<160x128xf32, #tpu.memory_space<vmem>>, vector<160x128xf32>
    %cst = arith.constant dense<0.000000e+00> : vector<8x128xf32>
    %30 = tpu.matmul %28, %29, %cst {dimension_numbers = #tpu.dot_dimension_numbers<[1], [0], [0], [1], [0, 0, 1, 1], [], []>, precision = #tpu.contract_precision<fp32>} : vector<8x160xf32>, vector<160x128xf32>, vector<8x128xf32> -> vector<8x128xf32>
    %c0_3 = arith.constant 0 : index
    %c0_4 = arith.constant 0 : index
    %31 = vector.load %arg3[%c0_3, %c0_4] : memref<8x128xf32, #tpu.memory_space<vmem>>, vector<8x128xf32>
    tpu.vector_store %arg3[%c0_3, %c0_4], %30 {strides = array<i32>} : memref<8x128xf32, #tpu.memory_space<vmem>>, vector<8x128xf32>,
    return
  }
  func.func @transform_0(%arg0: i32) -> (i32, i32) {
    %c0_i32 = arith.constant 0 : i32
    %c0_i32_0 = arith.constant 0 : i32
    return %arg0, %c0_i32 : i32, i32
  }
  func.func @transform_1(%arg0: i32) -> (i32, i32) {
    %c0_i32 = arith.constant 0 : i32
    %c0_i32_0 = arith.constant 0 : i32
    %c0_i32_1 = arith.constant 0 : i32
    return %c0_i32, %c0_i32_0 : i32, i32
  }
  func.func @transform_2(%arg0: i32) -> (i32, i32) {
    %c0_i32 = arith.constant 0 : i32
    %c0_i32_0 = arith.constant 0 : i32
    return %arg0, %c0_i32 : i32, i32
  }
}

</mosaic_0001>

<llo_original>
// kernel: tpu_custom_call.1
$region0: #{tpu_custom_call.1}
  #allocation0 [shape = 'u32[]', space=smem, size = 0x4, offset = 0x4, fixed_abs, tag = 'smem constant byte address 0x4 - core index']
  #allocation1 [shape = 'u32[144,128]{1,0:T(1,128)}', space=vmem, size = 0x12000, scoped, tag = 'internal scratch']
  %s0 = inlined_call_operand.vmem [shape: s32[8,4], index: 0, kind: input, shape index: {}]
  %s1 = inlined_call_operand.hbm [shape: f32[160,128], index: 1, kind: input, shape index: {}]
  %s2 = inlined_call_operand.hbm [shape: f32[8,128], index: 2, kind: output, shape index: {}]
  %s3 = sld [smem:[#allocation0]]
  $region22: #{tpu_custom_call.1} parent=0
    _
  %s5 = ssub.s32 1, %s3
  %s6 = scalar_select 0, %s5, %s3
  $region1: #{tpu_custom_call.1} parent=0
    #allocation2 [shape = 'u8[81920]{0}', space=vmem, size = 0x14000, scoped, tag = 'input window, operand 1, single buffered']
    #allocation3 [shape = 's32[1]{0}', space=sflag, size = 0x4, scoped, tag = 'scoped memory for tpu_custom_call.1']
    #allocation4 [shape = 's32[1]{0}', space=sflag, size = 0x4, scoped, tag = 'scoped memory for tpu_custom_call.1']
    #allocation5 [shape = 'u8[4096]{0}', space=vmem, size = 0x1000, scoped, tag = 'output window, operand 0, single buffered']
    %7 = vsyncpa [#allocation3], 0
    %8 = vsyncpa [#allocation4], 0
    // Predicated region
    $region2: #{tpu_custom_call.1} parent=1 // pred_check
      _
    $region3: #{tpu_custom_call.1} parent=1 // pred_check_branch
      %10 = sbr.rel (0) target = $region5
    $region4: #{tpu_custom_call.1} parent=1 // pred_region
      _
    $region5: #{tpu_custom_call.1} parent=1 // pred_fallthru
      _
    // Predicated region
    $region6: #{tpu_custom_call.1} parent=1 // pred_check
      _
    $region7: #{tpu_custom_call.1} parent=1 // pred_check_branch
      %12 = sbr.rel (0) target = $region9
    $region8: #{tpu_custom_call.1} parent=1 // pred_region
      %s14 = ssub.s32 2560, 2560
      %15 = vsyncadd [#allocation3], %s14
      %s16 = sshll.u32 [#allocation2], 4
      %s17 = int_to_ptr.vmem [resolvable:$true] %s16
      %22 = dma.hbm_to_vmem [thread:$0]  %s1, 2560, %s17, [#allocation3], 128, 128, 8
    $region9: #{tpu_custom_call.1} parent=1 // pred_fallthru
      _
    // Predicated region
    $region10: #{tpu_custom_call.1} parent=1 // pred_check
      _
    $region11: #{tpu_custom_call.1} parent=1 // pred_check_branch
      %24 = sbr.rel (0) target = $region13
    $region12: #{tpu_custom_call.1} parent=1 // pred_region
      %25 = dma.done [#allocation3], 2560
    $region13: #{tpu_custom_call.1} parent=1 // pred_fallthru
      _
    %v26 = vld [vmem:[%s0] sm:$0xff]
    %vm27 = vcmp.gt.s32.totalorder %v26, 0
    %v28 = vsel %vm27, %v26, 0
    %vm29 = vcmp.lt.s32.totalorder %v28, 37
    %v30 = vsel %vm29, %v28, 37
    %v31 = vlaneseq
    %v32 = vand.u32 %v31, 127
    %v33 = vadd.s32 %v32, 128
    %34 = vset.pattern.permute.xlu0 0
    %35 = vperm.xlu0 %34, %v30
    %v36 = vpop.permute.xlu0 %35
    %vm37 = vcmp.eq.s32.totalorder %v32, %v36
    %vm38 = vcmp.eq.s32.totalorder %v33, %v36
    %v39 = vadd.s32 %v30, 40
    %40 = vset.pattern.permute.xlu0 1
    %41 = vperm.xlu0 %40, %v39
    %v42 = vpop.permute.xlu0 %41
    %vm43 = vcmp.eq.s32.totalorder %v32, %v42
    %vm44 = vcmp.eq.s32.totalorder %v33, %v42
    %vm45 = vmor %vm37, %vm43
    %vm46 = vmor %vm38, %vm44
    %v47 = vadd.s32 %v30, 80
    %48 = vset.pattern.permute.xlu0 2
    %49 = vperm.xlu0 %48, %v47
    %v50 = vpop.permute.xlu0 %49
    %vm51 = vcmp.eq.s32.totalorder %v32, %v50
    %vm52 = vcmp.eq.s32.totalorder %v33, %v50
    %vm53 = vmor %vm45, %vm51
    %vm54 = vmor %vm46, %vm52
    %v55 = vadd.s32 %v30, 120
    %56 = vset.pattern.permute.xlu0 3
    %57 = vperm.xlu0 %56, %v55
    %v58 = vpop.permute.xlu0 %57
    %vm59 = vcmp.eq.s32.totalorder %v32, %v58
    %vm60 = vcmp.eq.s32.totalorder %v33, %v58
    %vm61 = vmor %vm53, %vm59
    %vm62 = vmor %vm54, %vm60
    %v63 = vsel %vm61, 1, 0
    %v64 = vsel %vm62, 1, 0
    %v65 = vcvt.s32.f32 %v63
    %v66 = vcvt.s32.f32 %v64
    %v67 = vld [vmem:[#allocation2] sm:$0xff]
    %v68 = vld [vmem:[#allocation2 + $0x8] sm:$0xff]
    %v69 = vld [vmem:[#allocation2 + $0x10] sm:$0xff]
    %v70 = vld [vmem:[#allocation2 + $0x18] sm:$0xff]
    %v71 = vld [vmem:[#allocation2 + $0x20] sm:$0xff]
    %v72 = vld [vmem:[#allocation2 + $0x28] sm:$0xff]
    %v73 = vld [vmem:[#allocation2 + $0x30] sm:$0xff]
    %v74 = vld [vmem:[#allocation2 + $0x38] sm:$0xff]
    %v75 = vld [vmem:[#allocation2 + $0x40] sm:$0xff]
    %v76 = vld [vmem:[#allocation2 + $0x48] sm:$0xff]
    %v77 = vld [vmem:[#allocation2 + $0x50] sm:$0xff]
    %v78 = vld [vmem:[#allocation2 + $0x58] sm:$0xff]
    %v79 = vld [vmem:[#allocation2 + $0x60] sm:$0xff]
    %v80 = vld [vmem:[#allocation2 + $0x68] sm:$0xff]
    %v81 = vld [vmem:[#allocation2 + $0x70] sm:$0xff]
    %v82 = vld [vmem:[#allocation2 + $0x78] sm:$0xff]
    %v83 = vld [vmem:[#allocation2 + $0x80] sm:$0xff]
    %v84 = vld [vmem:[#allocation2 + $0x88] sm:$0xff]
    %v85 = vld [vmem:[#allocation2 + $0x90] sm:$0xff]
    %v86 = vld [vmem:[#allocation2 + $0x98] sm:$0xff]
    %vm87 = vcmask 261120
    %v89 = vsel %vm87, %v66, 0
    %91 = vmatprep.subr.mxu0 0.0
    %v92 = vand.u32 %v82, 4294901760
    %93 = vmatpush1.msra.mxu0 %v92
    %94 = vmatprep.subr.mxu0 0.0
    %v95 = vand.u32 %v81, 4294901760
    %96 = vmatpush1.msra.mxu0 %v95
    %97 = vmatprep.subr.mxu0 0.0
    %v98 = vand.u32 %v80, 4294901760
    %99 = vmatpush1.msra.mxu0 %v98
    %100 = vmatprep.subr.mxu0 0.0
    %v101 = vand.u32 %v79, 4294901760
    %102 = vmatpush1.msra.mxu0 %v101
    %103 = vmatprep.subr.mxu0 0.0
    %v104 = vand.u32 %v78, 4294901760
    %105 = vmatpush1.msra.mxu0 %v104
    %106 = vmatprep.subr.mxu0 0.0
    %v107 = vand.u32 %v77, 4294901760
    %108 = vmatpush1.msra.mxu0 %v107
    %109 = vmatprep.subr.mxu0 0.0
    %v110 = vand.u32 %v76, 4294901760
    %111 = vmatpush1.msra.mxu0 %v110
    %112 = vmatprep.subr.mxu0 0.0
    %v113 = vand.u32 %v75, 4294901760
    %114 = vmatpush1.msra.mxu0 %v113
    %115 = vmatprep.subr.mxu0 0.0
    %v116 = vand.u32 %v74, 4294901760
    %117 = vmatpush1.msra.mxu0 %v116
    %118 = vmatprep.subr.mxu0 0.0
    %v119 = vand.u32 %v73, 4294901760
    %120 = vmatpush1.msra.mxu0 %v119
    %121 = vmatprep.subr.mxu0 0.0
    %v122 = vand.u32 %v72, 4294901760
    %123 = vmatpush1.msra.mxu0 %v122
    %124 = vmatprep.subr.mxu0 0.0
    %v125 = vand.u32 %v71, 4294901760
    %126 = vmatpush1.msra.mxu0 %v125
    %127 = vmatprep.subr.mxu0 0.0
    %v128 = vand.u32 %v70, 4294901760
    %129 = vmatpush1.msra.mxu0 %v128
    %130 = vmatprep.subr.mxu0 0.0
    %v131 = vand.u32 %v69, 4294901760
    %132 = vmatpush1.msra.mxu0 %v131
    %133 = vmatprep.subr.mxu0 0.0
    %v134 = vand.u32 %v68, 4294901760
    %135 = vmatpush1.msra.mxu0 %v134
    %136 = vmatprep.subr.mxu0 0.0
    %v137 = vand.u32 %v67, 4294901760
    %138 = vmatpush1.msra.mxu0 %v137
    %139 = vmatprep.subr.mxu0 0.0
    %140 = vmatpush2.msra.mxu0 0.0
    %141 = vmatprep.subr.mxu0 0.0
    %142 = vmatpush2.msra.mxu0 0.0
    %143 = vmatprep.subr.mxu0 0.0
    %144 = vmatpush2.msra.mxu0 0.0
    %145 = vmatprep.subr.mxu0 0.0
    %146 = vmatpush2.msra.mxu0 0.0
    %147 = vmatprep.subr.mxu0 0.0
    %148 = vmatpush2.msra.mxu0 0.0
    %149 = vmatprep.subr.mxu0 0.0
    %150 = vmatpush2.msra.mxu0 0.0
    %151 = vmatprep.subr.mxu0 0.0
    %152 = vmatpush2.msra.mxu0 0.0
    %153 = vmatprep.subr.mxu0 0.0
    %154 = vmatpush2.msra.mxu0 0.0
    %155 = vmatprep.subr.mxu0 0.0
    %156 = vmatpush2.msra.mxu0 0.0
    %157 = vmatprep.subr.mxu0 0.0
    %158 = vmatpush2.msra.mxu0 0.0
    %159 = vmatprep.subr.mxu0 0.0
    %160 = vmatpush2.msra.mxu0 0.0
    %161 = vmatprep.subr.mxu0 0.0
    %162 = vmatpush2.msra.mxu0 0.0
    %163 = vmatprep.subr.mxu0 0.0
    %v164 = vand.u32 %v86, 4294901760
    %165 = vmatpush2.msra.mxu0 %v164
    %166 = vmatprep.subr.mxu0 0.0
    %v167 = vand.u32 %v85, 4294901760
    %168 = vmatpush2.msra.mxu0 %v167
    %169 = vmatprep.subr.mxu0 0.0
    %v170 = vand.u32 %v84, 4294901760
    %171 = vmatpush2.msra.mxu0 %v170
    %172 = vmatprep.subr.mxu0 0.0
    %v173 = vand.u32 %v83, 4294901760
    %174 = vmatpush2.msra.mxu0 %v173
    %v175 = vand.u32 %v89, 4294901760
    %v176 = vsub.f32 %v89, %v175
    %v177 = vand.u32 %v176, 4294901760
    %v178 = vsub.f32 %v176, %v177
    %v179 = vand.u32 %v178, 4294901760
    %180 = vmatprep.mubr.f32.mxu0 %v179
    %v181 = vand.u32 %v65, 4294901760
    %v182 = vsub.f32 %v65, %v181
    %v183 = vand.u32 %v182, 4294901760
    %v184 = vsub.f32 %v182, %v183
    %v185 = vand.u32 %v184, 4294901760
    %186 = vmatmul.mubr.f32.gmra.mxu0 %v185
    %v187 = vpop.f32.mrf.mxu0
    %v188 = vadd.f32 0.0, %v187
    %v189 = vpop.f32.mrf.mxu0
    %190 = vdwg.mxu0
    %191 = vmatprep.subr.mxu0 0.0
    %v192 = vand.u32 %v82, 4294901760
    %v193 = vsub.f32 %v82, %v192
    %v194 = vand.u32 %v193, 4294901760
    %v195 = vsub.f32 %v193, %v194
    %v196 = vand.u32 %v195, 4294901760
    %197 = vmatpush1.msra.mxu0 %v196
    %198 = vmatprep.subr.mxu0 0.0
    %v199 = vand.u32 %v81, 4294901760
    %v200 = vsub.f32 %v81, %v199
    %v201 = vand.u32 %v200, 4294901760
    %v202 = vsub.f32 %v200, %v201
    %v203 = vand.u32 %v202, 4294901760
    %204 = vmatpush1.msra.mxu0 %v203
    %205 = vmatprep.subr.mxu0 0.0
    %v206 = vand.u32 %v80, 4294901760
    %v207 = vsub.f32 %v80, %v206
    %v208 = vand.u32 %v207, 4294901760
    %v209 = vsub.f32 %v207, %v208
    %v210 = vand.u32 %v209, 4294901760
    %211 = vmatpush1.msra.mxu0 %v210
    %212 = vmatprep.subr.mxu0 0.0
    %v213 = vand.u32 %v79, 4294901760
    %v214 = vsub.f32 %v79, %v213
    %v215 = vand.u32 %v214, 4294901760
    %v216 = vsub.f32 %v214, %v215
    %v217 = vand.u32 %v216, 4294901760
    %218 = vmatpush1.msra.mxu0 %v217
    %219 = vmatprep.subr.mxu0 0.0
    %v220 = vand.u32 %v78, 4294901760
    %v221 = vsub.f32 %v78, %v220
    %v222 = vand.u32 %v221, 4294901760
    %v223 = vsub.f32 %v221, %v222
    %v224 = vand.u32 %v223, 4294901760
    %225 = vmatpush1.msra.mxu0 %v224
    %226 = vmatprep.subr.mxu0 0.0
    %v227 = vand.u32 %v77, 4294901760
    %v228 = vsub.f32 %v77, %v227
    %v229 = vand.u32 %v228, 4294901760
    %v230 = vsub.f32 %v228, %v229
    %v231 = vand.u32 %v230, 4294901760
    %232 = vmatpush1.msra.mxu0 %v231
    %233 = vmatprep.subr.mxu0 0.0
    %v234 = vand.u32 %v76, 4294901760
    %v235 = vsub.f32 %v76, %v234
    %v236 = vand.u32 %v235, 4294901760
    %v237 = vsub.f32 %v235, %v236
    %v238 = vand.u32 %v237, 4294901760
    %239 = vmatpush1.msra.mxu0 %v238
    %240 = vmatprep.subr.mxu0 0.0
    %v241 = vand.u32 %v75, 4294901760
    %v242 = vsub.f32 %v75, %v241
    %v243 = vand.u32 %v242, 4294901760
    %v244 = vsub.f32 %v242, %v243
    %v245 = vand.u32 %v244, 4294901760
    %246 = vmatpush1.msra.mxu0 %v245
    %247 = vmatprep.subr.mxu0 0.0
    %v248 = vand.u32 %v74, 4294901760
    %v249 = vsub.f32 %v74, %v248
    %v250 = vand.u32 %v249, 4294901760
    %v251 = vsub.f32 %v249, %v250
    %v252 = vand.u32 %v251, 4294901760
    %253 = vmatpush1.msra.mxu0 %v252
    %254 = vmatprep.subr.mxu0 0.0
    %v255 = vand.u32 %v73, 4294901760
    %v256 = vsub.f32 %v73, %v255
    %v257 = vand.u32 %v256, 4294901760
    %v258 = vsub.f32 %v256, %v257
    %v259 = vand.u32 %v258, 4294901760
    %260 = vmatpush1.msra.mxu0 %v259
    %261 = vmatprep.subr.mxu0 0.0
    %v262 = vand.u32 %v72, 4294901760
    %v263 = vsub.f32 %v72, %v262
    %v264 = vand.u32 %v263, 4294901760
    %v265 = vsub.f32 %v263, %v264
    %v266 = vand.u32 %v265, 4294901760
    %267 = vmatpush1.msra.mxu0 %v266
    %268 = vmatprep.subr.mxu0 0.0
    %v269 = vand.u32 %v71, 4294901760
    %v270 = vsub.f32 %v71, %v269
    %v271 = vand.u32 %v270, 4294901760
    %v272 = vsub.f32 %v270, %v271
    %v273 = vand.u32 %v272, 4294901760
    %274 = vmatpush1.msra.mxu0 %v273
    %275 = vmatprep.subr.mxu0 0.0
    %v276 = vand.u32 %v70, 4294901760
    %v277 = vsub.f32 %v70, %v276
    %v278 = vand.u32 %v277, 4294901760
    %v279 = vsub.f32 %v277, %v278
    %v280 = vand.u32 %v279, 4294901760
    %281 = vmatpush1.msra.mxu0 %v280
    %282 = vmatprep.subr.mxu0 0.0
    %v283 = vand.u32 %v69, 4294901760
    %v284 = vsub.f32 %v69, %v283
    %v285 = vand.u32 %v284, 4294901760
    %v286 = vsub.f32 %v284, %v285
    %v287 = vand.u32 %v286, 4294901760
    %288 = vmatpush1.msra.mxu0 %v287
    %289 = vmatprep.subr.mxu0 0.0
    %v290 = vand.u32 %v68, 4294901760
    %v291 = vsub.f32 %v68, %v290
    %v292 = vand.u32 %v291, 4294901760
    %v293 = vsub.f32 %v291, %v292
    %v294 = vand.u32 %v293, 4294901760
    %295 = vmatpush1.msra.mxu0 %v294
    %296 = vmatprep.subr.mxu0 0.0
    %v297 = vand.u32 %v67, 4294901760
    %v298 = vsub.f32 %v67, %v297
    %v299 = vand.u32 %v298, 4294901760
    %v300 = vsub.f32 %v298, %v299
    %v301 = vand.u32 %v300, 4294901760
    %302 = vmatpush1.msra.mxu0 %v301
    %303 = vmatprep.subr.mxu0 0.0
    %304 = vmatpush2.msra.mxu0 0.0
    %305 = vmatprep.subr.mxu0 0.0
    %306 = vmatpush2.msra.mxu0 0.0
    %307 = vmatprep.subr.mxu0 0.0
    %308 = vmatpush2.msra.mxu0 0.0
    %309 = vmatprep.subr.mxu0 0.0
    %310 = vmatpush2.msra.mxu0 0.0
    %311 = vmatprep.subr.mxu0 0.0
    %312 = vmatpush2.msra.mxu0 0.0
    %313 = vmatprep.subr.mxu0 0.0
    %314 = vmatpush2.msra.mxu0 0.0
    %315 = vmatprep.subr.mxu0 0.0
    %316 = vmatpush2.msra.mxu0 0.0
    %317 = vmatprep.subr.mxu0 0.0
    %318 = vmatpush2.msra.mxu0 0.0
    %319 = vmatprep.subr.mxu0 0.0
    %320 = vmatpush2.msra.mxu0 0.0
    %321 = vmatprep.subr.mxu0 0.0
    %322 = vmatpush2.msra.mxu0 0.0
    %323 = vmatprep.subr.mxu0 0.0
    %324 = vmatpush2.msra.mxu0 0.0
    %325 = vmatprep.subr.mxu0 0.0
    %326 = vmatpush2.msra.mxu0 0.0
    %327 = vmatprep.subr.mxu0 0.0
    %v328 = vand.u32 %v86, 4294901760
    %v329 = vsub.f32 %v86, %v328
    %v330 = vand.u32 %v329, 4294901760
    %v331 = vsub.f32 %v329, %v330
    %v332 = vand.u32 %v331, 4294901760
    %333 = vmatpush2.msra.mxu0 %v332
    %334 = vmatprep.subr.mxu0 0.0
    %v335 = vand.u32 %v85, 4294901760
    %v336 = vsub.f32 %v85, %v335
    %v337 = vand.u32 %v336, 4294901760
    %v338 = vsub.f32 %v336, %v337
    %v339 = vand.u32 %v338, 4294901760
    %340 = vmatpush2.msra.mxu0 %v339
    %341 = vmatprep.subr.mxu0 0.0
    %v342 = vand.u32 %v84, 4294901760
    %v343 = vsub.f32 %v84, %v342
    %v344 = vand.u32 %v343, 4294901760
    %v345 = vsub.f32 %v343, %v344
    %v346 = vand.u32 %v345, 4294901760
    %347 = vmatpush2.msra.mxu0 %v346
    %348 = vmatprep.subr.mxu0 0.0
    %v349 = vand.u32 %v83, 4294901760
    %v350 = vsub.f32 %v83, %v349
    %v351 = vand.u32 %v350, 4294901760
    %v352 = vsub.f32 %v350, %v351
    %v353 = vand.u32 %v352, 4294901760
    %354 = vmatpush2.msra.mxu0 %v353
    %v355 = vand.u32 %v89, 4294901760
    %356 = vmatprep.mubr.f32.mxu0 %v355
    %v357 = vand.u32 %v65, 4294901760
    %358 = vmatmul.mubr.f32.gmra.mxu0 %v357
    %v359 = vpop.f32.mrf.mxu0
    %v360 = vadd.f32 %v188, %v359
    %v361 = vpop.f32.mrf.mxu0
    %362 = vdwg.mxu0
    %363 = vmatprep.subr.mxu0 0.0
    %v364 = vand.u32 %v82, 4294901760
    %v365 = vsub.f32 %v82, %v364
    %366 = vmatpush1.msra.mxu0 %v365
    %367 = vmatprep.subr.mxu0 0.0
    %v368 = vand.u32 %v81, 4294901760
    %v369 = vsub.f32 %v81, %v368
    %370 = vmatpush1.msra.mxu0 %v369
    %371 = vmatprep.subr.mxu0 0.0
    %v372 = vand.u32 %v80, 4294901760
    %v373 = vsub.f32 %v80, %v372
    %374 = vmatpush1.msra.mxu0 %v373
    %375 = vmatprep.subr.mxu0 0.0
    %v376 = vand.u32 %v79, 4294901760
    %v377 = vsub.f32 %v79, %v376
    %378 = vmatpush1.msra.mxu0 %v377
    %379 = vmatprep.subr.mxu0 0.0
    %v380 = vand.u32 %v78, 4294901760
    %v381 = vsub.f32 %v78, %v380
    %382 = vmatpush1.msra.mxu0 %v381
    %383 = vmatprep.subr.mxu0 0.0
    %v384 = vand.u32 %v77, 4294901760
    %v385 = vsub.f32 %v77, %v384
    %386 = vmatpush1.msra.mxu0 %v385
    %387 = vmatprep.subr.mxu0 0.0
    %v388 = vand.u32 %v76, 4294901760
    %v389 = vsub.f32 %v76, %v388
    %390 = vmatpush1.msra.mxu0 %v389
    %391 = vmatprep.subr.mxu0 0.0
    %v392 = vand.u32 %v75, 4294901760
    %v393 = vsub.f32 %v75, %v392
    %394 = vmatpush1.msra.mxu0 %v393
    %395 = vmatprep.subr.mxu0 0.0
    %v396 = vand.u32 %v74, 4294901760
    %v397 = vsub.f32 %v74, %v396
    %398 = vmatpush1.msra.mxu0 %v397
    %399 = vmatprep.subr.mxu0 0.0
    %v400 = vand.u32 %v73, 4294901760
    %v401 = vsub.f32 %v73, %v400
    %402 = vmatpush1.msra.mxu0 %v401
    %403 = vmatprep.subr.mxu0 0.0
    %v404 = vand.u32 %v72, 4294901760
    %v405 = vsub.f32 %v72, %v404
    %406 = vmatpush1.msra.mxu0 %v405
    %407 = vmatprep.subr.mxu0 0.0
    %v408 = vand.u32 %v71, 4294901760
    %v409 = vsub.f32 %v71, %v408
    %410 = vmatpush1.msra.mxu0 %v409
    %411 = vmatprep.subr.mxu0 0.0
    %v412 = vand.u32 %v70, 4294901760
    %v413 = vsub.f32 %v70, %v412
    %414 = vmatpush1.msra.mxu0 %v413
    %415 = vmatprep.subr.mxu0 0.0
    %v416 = vand.u32 %v69, 4294901760
    %v417 = vsub.f32 %v69, %v416
    %418 = vmatpush1.msra.mxu0 %v417
    %419 = vmatprep.subr.mxu0 0.0
    %v420 = vand.u32 %v68, 4294901760
    %v421 = vsub.f32 %v68, %v420
    %422 = vmatpush1.msra.mxu0 %v421
    %423 = vmatprep.subr.mxu0 0.0
    %v424 = vand.u32 %v67, 4294901760
    %v425 = vsub.f32 %v67, %v424
    %426 = vmatpush1.msra.mxu0 %v425
    %427 = vmatprep.subr.mxu0 0.0
    %428 = vmatpush2.msra.mxu0 0.0
    %429 = vmatprep.subr.mxu0 0.0
    %430 = vmatpush2.msra.mxu0 0.0
    %431 = vmatprep.subr.mxu0 0.0
    %432 = vmatpush2.msra.mxu0 0.0
    %433 = vmatprep.subr.mxu0 0.0
    %434 = vmatpush2.msra.mxu0 0.0
    %435 = vmatprep.subr.mxu0 0.0
    %436 = vmatpush2.msra.mxu0 0.0
    %437 = vmatprep.subr.mxu0 0.0
    %438 = vmatpush2.msra.mxu0 0.0
    %439 = vmatprep.subr.mxu0 0.0
    %440 = vmatpush2.msra.mxu0 0.0
    %441 = vmatprep.subr.mxu0 0.0
    %442 = vmatpush2.msra.mxu0 0.0
    %443 = vmatprep.subr.mxu0 0.0
    %444 = vmatpush2.msra.mxu0 0.0
    %445 = vmatprep.subr.mxu0 0.0
    %446 = vmatpush2.msra.mxu0 0.0
    %447 = vmatprep.subr.mxu0 0.0
    %448 = vmatpush2.msra.mxu0 0.0
    %449 = vmatprep.subr.mxu0 0.0
    %450 = vmatpush2.msra.mxu0 0.0
    %451 = vmatprep.subr.mxu0 0.0
    %v452 = vand.u32 %v86, 4294901760
    %v453 = vsub.f32 %v86, %v452
    %454 = vmatpush2.msra.mxu0 %v453
    %455 = vmatprep.subr.mxu0 0.0
    %v456 = vand.u32 %v85, 4294901760
    %v457 = vsub.f32 %v85, %v456
    %458 = vmatpush2.msra.mxu0 %v457
    %459 = vmatprep.subr.mxu0 0.0
    %v460 = vand.u32 %v84, 4294901760
    %v461 = vsub.f32 %v84, %v460
    %462 = vmatpush2.msra.mxu0 %v461
    %463 = vmatprep.subr.mxu0 0.0
    %v464 = vand.u32 %v83, 4294901760
    %v465 = vsub.f32 %v83, %v464
    %466 = vmatpush2.msra.mxu0 %v465
    %v467 = vand.u32 %v89, 4294901760
    %v468 = vsub.f32 %v89, %v467
    %469 = vmatprep.mubr.f32.mxu0 %v468
    %v470 = vand.u32 %v65, 4294901760
    %v471 = vsub.f32 %v65, %v470
    %472 = vmatmul.mubr.f32.gmra.mxu0 %v471
    %v473 = vpop.f32.mrf.mxu0
    %v474 = vadd.f32 %v360, %v473
    %v475 = vpop.f32.mrf.mxu0
    %476 = vdwg.mxu0
    %477 = vmatprep.subr.mxu0 0.0
    %v478 = vand.u32 %v82, 4294901760
    %479 = vmatpush1.msra.mxu0 %v478
    %480 = vmatprep.subr.mxu0 0.0
    %v481 = vand.u32 %v81, 4294901760
    %482 = vmatpush1.msra.mxu0 %v481
    %483 = vmatprep.subr.mxu0 0.0
    %v484 = vand.u32 %v80, 4294901760
    %485 = vmatpush1.msra.mxu0 %v484
    %486 = vmatprep.subr.mxu0 0.0
    %v487 = vand.u32 %v79, 4294901760
    %488 = vmatpush1.msra.mxu0 %v487
    %489 = vmatprep.subr.mxu0 0.0
    %v490 = vand.u32 %v78, 4294901760
    %491 = vmatpush1.msra.mxu0 %v490
    %492 = vmatprep.subr.mxu0 0.0
    %v493 = vand.u32 %v77, 4294901760
    %494 = vmatpush1.msra.mxu0 %v493
    %495 = vmatprep.subr.mxu0 0.0
    %v496 = vand.u32 %v76, 4294901760
    %497 = vmatpush1.msra.mxu0 %v496
    %498 = vmatprep.subr.mxu0 0.0
    %v499 = vand.u32 %v75, 4294901760
    %500 = vmatpush1.msra.mxu0 %v499
    %501 = vmatprep.subr.mxu0 0.0
    %v502 = vand.u32 %v74, 4294901760
    %503 = vmatpush1.msra.mxu0 %v502
    %504 = vmatprep.subr.mxu0 0.0
    %v505 = vand.u32 %v73, 4294901760
    %506 = vmatpush1.msra.mxu0 %v505
    %507 = vmatprep.subr.mxu0 0.0
    %v508 = vand.u32 %v72, 4294901760
    %509 = vmatpush1.msra.mxu0 %v508
    %510 = vmatprep.subr.mxu0 0.0
    %v511 = vand.u32 %v71, 4294901760
    %512 = vmatpush1.msra.mxu0 %v511
    %513 = vmatprep.subr.mxu0 0.0
    %v514 = vand.u32 %v70, 4294901760
    %515 = vmatpush1.msra.mxu0 %v514
    %516 = vmatprep.subr.mxu0 0.0
    %v517 = vand.u32 %v69, 4294901760
    %518 = vmatpush1.msra.mxu0 %v517
    %519 = vmatprep.subr.mxu0 0.0
    %v520 = vand.u32 %v68, 4294901760
    %521 = vmatpush1.msra.mxu0 %v520
    %522 = vmatprep.subr.mxu0 0.0
    %v523 = vand.u32 %v67, 4294901760
    %524 = vmatpush1.msra.mxu0 %v523
    %525 = vmatprep.subr.mxu0 0.0
    %526 = vmatpush2.msra.mxu0 0.0
    %527 = vmatprep.subr.mxu0 0.0
    %528 = vmatpush2.msra.mxu0 0.0
    %529 = vmatprep.subr.mxu0 0.0
    %530 = vmatpush2.msra.mxu0 0.0
    %531 = vmatprep.subr.mxu0 0.0
    %532 = vmatpush2.msra.mxu0 0.0
    %533 = vmatprep.subr.mxu0 0.0
    %534 = vmatpush2.msra.mxu0 0.0
    %535 = vmatprep.subr.mxu0 0.0
    %536 = vmatpush2.msra.mxu0 0.0
    %537 = vmatprep.subr.mxu0 0.0
    %538 = vmatpush2.msra.mxu0 0.0
    %539 = vmatprep.subr.mxu0 0.0
    %540 = vmatpush2.msra.mxu0 0.0
    %541 = vmatprep.subr.mxu0 0.0
    %542 = vmatpush2.msra.mxu0 0.0
    %543 = vmatprep.subr.mxu0 0.0
    %544 = vmatpush2.msra.mxu0 0.0
    %545 = vmatprep.subr.mxu0 0.0
    %546 = vmatpush2.msra.mxu0 0.0
    %547 = vmatprep.subr.mxu0 0.0
    %548 = vmatpush2.msra.mxu0 0.0
    %549 = vmatprep.subr.mxu0 0.0
    %v550 = vand.u32 %v86, 4294901760
    %551 = vmatpush2.msra.mxu0 %v550
    %552 = vmatprep.subr.mxu0 0.0
    %v553 = vand.u32 %v85, 4294901760
    %554 = vmatpush2.msra.mxu0 %v553
    %555 = vmatprep.subr.mxu0 0.0
    %v556 = vand.u32 %v84, 4294901760
    %557 = vmatpush2.msra.mxu0 %v556
    %558 = vmatprep.subr.mxu0 0.0
    %v559 = vand.u32 %v83, 4294901760
    %560 = vmatpush2.msra.mxu0 %v559
    %v561 = vand.u32 %v89, 4294901760
    %v562 = vsub.f32 %v89, %v561
    %v563 = vand.u32 %v562, 4294901760
    %564 = vmatprep.mubr.f32.mxu0 %v563
    %v565 = vand.u32 %v65, 4294901760
    %v566 = vsub.f32 %v65, %v565
    %v567 = vand.u32 %v566, 4294901760
    %568 = vmatmul.mubr.f32.gmra.mxu0 %v567
    %v569 = vpop.f32.mrf.mxu0
    %v570 = vadd.f32 %v474, %v569
    %v571 = vpop.f32.mrf.mxu0
    %572 = vdwg.mxu0
    %573 = vmatprep.subr.mxu0 0.0
    %v574 = vand.u32 %v82, 4294901760
    %v575 = vsub.f32 %v82, %v574
    %v576 = vand.u32 %v575, 4294901760
    %577 = vmatpush1.msra.mxu0 %v576
    %578 = vmatprep.subr.mxu0 0.0
    %v579 = vand.u32 %v81, 4294901760
    %v580 = vsub.f32 %v81, %v579
    %v581 = vand.u32 %v580, 4294901760
    %582 = vmatpush1.msra.mxu0 %v581
    %583 = vmatprep.subr.mxu0 0.0
    %v584 = vand.u32 %v80, 4294901760
    %v585 = vsub.f32 %v80, %v584
    %v586 = vand.u32 %v585, 4294901760
    %587 = vmatpush1.msra.mxu0 %v586
    %588 = vmatprep.subr.mxu0 0.0
    %v589 = vand.u32 %v79, 4294901760
    %v590 = vsub.f32 %v79, %v589
    %v591 = vand.u32 %v590, 4294901760
    %592 = vmatpush1.msra.mxu0 %v591
    %593 = vmatprep.subr.mxu0 0.0
    %v594 = vand.u32 %v78, 4294901760
    %v595 = vsub.f32 %v78, %v594
    %v596 = vand.u32 %v595, 4294901760
    %597 = vmatpush1.msra.mxu0 %v596
    %598 = vmatprep.subr.mxu0 0.0
    %v599 = vand.u32 %v77, 4294901760
    %v600 = vsub.f32 %v77, %v599
    %v601 = vand.u32 %v600, 4294901760
    %602 = vmatpush1.msra.mxu0 %v601
    %603 = vmatprep.subr.mxu0 0.0
    %v604 = vand.u32 %v76, 4294901760
    %v605 = vsub.f32 %v76, %v604
    %v606 = vand.u32 %v605, 4294901760
    %607 = vmatpush1.msra.mxu0 %v606
    %608 = vmatprep.subr.mxu0 0.0
    %v609 = vand.u32 %v75, 4294901760
    %v610 = vsub.f32 %v75, %v609
    %v611 = vand.u32 %v610, 4294901760
    %612 = vmatpush1.msra.mxu0 %v611
    %613 = vmatprep.subr.mxu0 0.0
    %v614 = vand.u32 %v74, 4294901760
    %v615 = vsub.f32 %v74, %v614
    %v616 = vand.u32 %v615, 4294901760
    %617 = vmatpush1.msra.mxu0 %v616
    %618 = vmatprep.subr.mxu0 0.0
    %v619 = vand.u32 %v73, 4294901760
    %v620 = vsub.f32 %v73, %v619
    %v621 = vand.u32 %v620, 4294901760
    %622 = vmatpush1.msra.mxu0 %v621
    %623 = vmatprep.subr.mxu0 0.0
    %v624 = vand.u32 %v72, 4294901760
    %v625 = vsub.f32 %v72, %v624
    %v626 = vand.u32 %v625, 4294901760
    %627 = vmatpush1.msra.mxu0 %v626
    %628 = vmatprep.subr.mxu0 0.0
    %v629 = vand.u32 %v71, 4294901760
    %v630 = vsub.f32 %v71, %v629
    %v631 = vand.u32 %v630, 4294901760
    %632 = vmatpush1.msra.mxu0 %v631
    %633 = vmatprep.subr.mxu0 0.0
    %v634 = vand.u32 %v70, 4294901760
    %v635 = vsub.f32 %v70, %v634
    %v636 = vand.u32 %v635, 4294901760
    %637 = vmatpush1.msra.mxu0 %v636
    %638 = vmatprep.subr.mxu0 0.0
    %v639 = vand.u32 %v69, 4294901760
    %v640 = vsub.f32 %v69, %v639
    %v641 = vand.u32 %v640, 4294901760
    %642 = vmatpush1.msra.mxu0 %v641
    %643 = vmatprep.subr.mxu0 0.0
    %v644 = vand.u32 %v68, 4294901760
    %v645 = vsub.f32 %v68, %v644
    %v646 = vand.u32 %v645, 4294901760
    %647 = vmatpush1.msra.mxu0 %v646
    %648 = vmatprep.subr.mxu0 0.0
    %v649 = vand.u32 %v67, 4294901760
    %v650 = vsub.f32 %v67, %v649
    %v651 = vand.u32 %v650, 4294901760
    %652 = vmatpush1.msra.mxu0 %v651
    %653 = vmatprep.subr.mxu0 0.0
    %654 = vmatpush2.msra.mxu0 0.0
    %655 = vmatprep.subr.mxu0 0.0
    %656 = vmatpush2.msra.mxu0 0.0
    %657 = vmatprep.subr.mxu0 0.0
    %658 = vmatpush2.msra.mxu0 0.0
    %659 = vmatprep.subr.mxu0 0.0
    %660 = vmatpush2.msra.mxu0 0.0
    %661 = vmatprep.subr.mxu0 0.0
    %662 = vmatpush2.msra.mxu0 0.0
    %663 = vmatprep.subr.mxu0 0.0
    %664 = vmatpush2.msra.mxu0 0.0
    %665 = vmatprep.subr.mxu0 0.0
    %666 = vmatpush2.msra.mxu0 0.0
    %667 = vmatprep.subr.mxu0 0.0
    %668 = vmatpush2.msra.mxu0 0.0
    %669 = vmatprep.subr.mxu0 0.0
    %670 = vmatpush2.msra.mxu0 0.0
    %671 = vmatprep.subr.mxu0 0.0
    %672 = vmatpush2.msra.mxu0 0.0
    %673 = vmatprep.subr.mxu0 0.0
    %674 = vmatpush2.msra.mxu0 0.0
    %675 = vmatprep.subr.mxu0 0.0
    %676 = vmatpush2.msra.mxu0 0.0
    %677 = vmatprep.subr.mxu0 0.0
    %v678 = vand.u32 %v86, 4294901760
    %v679 = vsub.f32 %v86, %v678
    %v680 = vand.u32 %v679, 4294901760
    %681 = vmatpush2.msra.mxu0 %v680
    %682 = vmatprep.subr.mxu0 0.0
    %v683 = vand.u32 %v85, 4294901760
    %v684 = vsub.f32 %v85, %v683
    %v685 = vand.u32 %v684, 4294901760
    %686 = vmatpush2.msra.mxu0 %v685
    %687 = vmatprep.subr.mxu0 0.0
    %v688 = vand.u32 %v84, 4294901760
    %v689 = vsub.f32 %v84, %v688
    %v690 = vand.u32 %v689, 4294901760
    %691 = vmatpush2.msra.mxu0 %v690
    %692 = vmatprep.subr.mxu0 0.0
    %v693 = vand.u32 %v83, 4294901760
    %v694 = vsub.f32 %v83, %v693
    %v695 = vand.u32 %v694, 4294901760
    %696 = vmatpush2.msra.mxu0 %v695
    %v697 = vand.u32 %v89, 4294901760
    %698 = vmatprep.mubr.f32.mxu0 %v697
    %v699 = vand.u32 %v65, 4294901760
    %700 = vmatmul.mubr.f32.gmra.mxu0 %v699
    %v701 = vpop.f32.mrf.mxu0
    %v702 = vadd.f32 %v570, %v701
    %v703 = vpop.f32.mrf.mxu0
    %704 = vdwg.mxu0
    %705 = vmatprep.subr.mxu0 0.0
    %v706 = vand.u32 %v82, 4294901760
    %707 = vmatpush1.msra.mxu0 %v706
    %708 = vmatprep.subr.mxu0 0.0
    %v709 = vand.u32 %v81, 4294901760
    %710 = vmatpush1.msra.mxu0 %v709
    %711 = vmatprep.subr.mxu0 0.0
    %v712 = vand.u32 %v80, 4294901760
    %713 = vmatpush1.msra.mxu0 %v712
    %714 = vmatprep.subr.mxu0 0.0
    %v715 = vand.u32 %v79, 4294901760
    %716 = vmatpush1.msra.mxu0 %v715
    %717 = vmatprep.subr.mxu0 0.0
    %v718 = vand.u32 %v78, 4294901760
    %719 = vmatpush1.msra.mxu0 %v718
    %720 = vmatprep.subr.mxu0 0.0
    %v721 = vand.u32 %v77, 4294901760
    %722 = vmatpush1.msra.mxu0 %v721
    %723 = vmatprep.subr.mxu0 0.0
    %v724 = vand.u32 %v76, 4294901760
    %725 = vmatpush1.msra.mxu0 %v724
    %726 = vmatprep.subr.mxu0 0.0
    %v727 = vand.u32 %v75, 4294901760
    %728 = vmatpush1.msra.mxu0 %v727
    %729 = vmatprep.subr.mxu0 0.0
    %v730 = vand.u32 %v74, 4294901760
    %731 = vmatpush1.msra.mxu0 %v730
    %732 = vmatprep.subr.mxu0 0.0
    %v733 = vand.u32 %v73, 4294901760
    %734 = vmatpush1.msra.mxu0 %v733
    %735 = vmatprep.subr.mxu0 0.0
    %v736 = vand.u32 %v72, 4294901760
    %737 = vmatpush1.msra.mxu0 %v736
    %738 = vmatprep.subr.mxu0 0.0
    %v739 = vand.u32 %v71, 4294901760
    %740 = vmatpush1.msra.mxu0 %v739
    %741 = vmatprep.subr.mxu0 0.0
    %v742 = vand.u32 %v70, 4294901760
    %743 = vmatpush1.msra.mxu0 %v742
    %744 = vmatprep.subr.mxu0 0.0
    %v745 = vand.u32 %v69, 4294901760
    %746 = vmatpush1.msra.mxu0 %v745
    %747 = vmatprep.subr.mxu0 0.0
    %v748 = vand.u32 %v68, 4294901760
    %749 = vmatpush1.msra.mxu0 %v748
    %750 = vmatprep.subr.mxu0 0.0
    %v751 = vand.u32 %v67, 4294901760
    %752 = vmatpush1.msra.mxu0 %v751
    %753 = vmatprep.subr.mxu0 0.0
    %754 = vmatpush2.msra.mxu0 0.0
    %755 = vmatprep.subr.mxu0 0.0
    %756 = vmatpush2.msra.mxu0 0.0
    %757 = vmatprep.subr.mxu0 0.0
    %758 = vmatpush2.msra.mxu0 0.0
    %759 = vmatprep.subr.mxu0 0.0
    %760 = vmatpush2.msra.mxu0 0.0
    %761 = vmatprep.subr.mxu0 0.0
    %762 = vmatpush2.msra.mxu0 0.0
    %763 = vmatprep.subr.mxu0 0.0
    %764 = vmatpush2.msra.mxu0 0.0
    %765 = vmatprep.subr.mxu0 0.0
    %766 = vmatpush2.msra.mxu0 0.0
    %767 = vmatprep.subr.mxu0 0.0
    %768 = vmatpush2.msra.mxu0 0.0
    %769 = vmatprep.subr.mxu0 0.0
    %770 = vmatpush2.msra.mxu0 0.0
    %771 = vmatprep.subr.mxu0 0.0
    %772 = vmatpush2.msra.mxu0 0.0
    %773 = vmatprep.subr.mxu0 0.0
    %774 = vmatpush2.msra.mxu0 0.0
    %775 = vmatprep.subr.mxu0 0.0
    %776 = vmatpush2.msra.mxu0 0.0
    %777 = vmatprep.subr.mxu0 0.0
    %v778 = vand.u32 %v86, 4294901760
    %779 = vmatpush2.msra.mxu0 %v778
    %780 = vmatprep.subr.mxu0 0.0
    %v781 = vand.u32 %v85, 4294901760
    %782 = vmatpush2.msra.mxu0 %v781
    %783 = vmatprep.subr.mxu0 0.0
    %v784 = vand.u32 %v84, 4294901760
    %785 = vmatpush2.msra.mxu0 %v784
    %786 = vmatprep.subr.mxu0 0.0
    %v787 = vand.u32 %v83, 4294901760
    %788 = vmatpush2.msra.mxu0 %v787
    %v789 = vand.u32 %v89, 4294901760
    %790 = vmatprep.mubr.f32.mxu0 %v789
    %v791 = vand.u32 %v65, 4294901760
    %792 = vmatmul.mubr.f32.gmra.mxu0 %v791
    %v793 = vpop.f32.mrf.mxu0
    %v794 = vadd.f32 %v702, %v793
    %v795 = vpop.f32.mrf.mxu0
    %796 = vdwg.mxu0
    %797 = vst [vmem:[#allocation5] sm:$0xff] %v794
    // Predicated region
    $region14: #{tpu_custom_call.1} parent=1 // pred_check
      _
    $region15: #{tpu_custom_call.1} parent=1 // pred_check_branch
      %799 = sbr.rel (0) target = $region17
    $region16: #{tpu_custom_call.1} parent=1 // pred_region
      %s801 = ssub.s32 128, 128
      %802 = vsyncadd [#allocation4], %s801
      %s804 = sshll.u32 [#allocation5], 4
      %s805 = int_to_ptr.vmem [resolvable:$true] %s804
      %807 = dma.vmem_to_hbm [thread:$0]  %s805, 128, %s2, [#allocation4]
    $region17: #{tpu_custom_call.1} parent=1 // pred_fallthru
      _
    // Predicated region
    $region18: #{tpu_custom_call.1} parent=1 // pred_check
      _
    $region19: #{tpu_custom_call.1} parent=1 // pred_check_branch
      %809 = sbr.rel (0) target = $region21
    $region20: #{tpu_custom_call.1} parent=1 // pred_region
      %810 = dma.done [#allocation4], 128
    $region21: #{tpu_custom_call.1} parent=1 // pred_fallthru
      _
    %811 = vsyncpa [#allocation3], 1
    %812 = vsyncpa [#allocation4], 1

</llo_original>
